<compile_context>
chip_gen: v5e
topology: v5e:2x2
jax: 0.10.0
libtpu: 0.0.40
codegen_flags: <defaults>
</compile_context>

<pallas_src>
import functools

import jax
import jax.numpy as jnp
import numpy as np
from jax import lax
from jax.experimental import pallas as pl
from jax.experimental.pallas import tpu as pltpu


# ----------------------------- cross entropy ------------------------------ #
def _xent_kernel(logits_ref, tgt_ref, out_ref, acc_ref, *, inv_hn):
    """Grid over classifier heads; accumulates sum(lse - picked) over heads."""
    h = pl.program_id(0)

    @pl.when(h == 0)
    def _init():
        acc_ref[0] = jnp.float32(0.0)

    lg = logits_ref[0]                                   # [N, C] f32
    tgt = tgt_ref[...]                                   # [N, 1] i32
    N, C = lg.shape
    class_iota = lax.broadcasted_iota(jnp.int32, (N, C), 1)

    m = jnp.max(lg, axis=-1, keepdims=True)
    lse = m + jnp.log(jnp.sum(jnp.exp(lg - m), axis=-1, keepdims=True))
    picked = jnp.sum(jnp.where(class_iota == tgt, lg, 0.0),
                     axis=-1, keepdims=True)
    acc_ref[0] += jnp.sum(lse - picked)

    @pl.when(h == pl.num_programs(0) - 1)
    def _fin():
        out_ref[0, 0] = acc_ref[0] * inv_hn


# ------------------------------ triplet term ------------------------------- #
def _triplet_kernel(idx_ref, emb_ref, out_ref, acc_ref,
                    *, margin, num_triplets, inv_t, needs_mask):
    """Grid over triplet tiles; one [2*TT,N]x[N,D] diff-selector matmul."""
    t = pl.program_id(0)
    last = pl.num_programs(0) - 1
    TT = idx_ref.shape[1]
    N = emb_ref.shape[0]

    @pl.when(t == 0)
    def _init():
        acc_ref[0] = jnp.float32(0.0)

    idx = idx_ref[...]                                   # [3, TT, 1] i32
    aa = jnp.concatenate([idx[0], idx[0]], axis=0)       # [2TT, 1]
    pn = jnp.concatenate([idx[1], idx[2]], axis=0)       # [2TT, 1]

    # Signed selector: row r of `sel` is onehot(a) - onehot(p or n); the
    # matmul output row is then exactly (e_a - e_p) / (e_a - e_n).
    col = lax.broadcasted_iota(jnp.int32, (2 * TT, N), 1)
    sel = (col == aa).astype(jnp.float32) - (col == pn).astype(jnp.float32)
    diff = jnp.dot(sel, emb_ref[...],
                   preferred_element_type=jnp.float32)   # [2TT, D]

    d_ap = jnp.sqrt(jnp.sum(diff[0:TT] ** 2, axis=-1, keepdims=True))
    d_an = jnp.sqrt(jnp.sum(diff[TT:2 * TT] ** 2, axis=-1, keepdims=True))
    hinge = jnp.maximum(d_ap - d_an + margin, 0.0)
    sq = hinge * hinge

    if needs_mask:
        # Only the final tile carries padded rows: mask there, plain sum else.
        @pl.when(t == last)
        def _tail():
            row = lax.broadcasted_iota(jnp.int32, (TT, 1), 0) + t * TT
            valid = (row < num_triplets).astype(jnp.float32)
            acc_ref[0] += jnp.sum(sq * valid)

        @pl.when(t != last)
        def _body():
            acc_ref[0] += jnp.sum(sq)
    else:
        acc_ref[0] += jnp.sum(sq)

    @pl.when(t == last)
    def _fin():
        out_ref[0, 0] = acc_ref[0] * inv_t


# --------------------------------- wrapper --------------------------------- #
def xent_triplet_loss_v2(embedding_classify, embedding, target, triplets,
                         margin, *, t_tile=256):
    """JAX/Pallas forward of XentTripletLossV2.

    embedding_classify: list of H arrays [N, C] (classifier logits)
    embedding:          [N, D] embeddings used for the triplet term
    target:             [N] int class labels
    triplets:           [T, 3] int32 (anchor, positive, negative) row indices
    """
    H = len(embedding_classify)
    N, C = embedding_classify[0].shape
    D = embedding.shape[1]
    T = int(triplets.shape[0])

    logits = jnp.stack([l.astype(jnp.float32) for l in embedding_classify])  # [H,N,C]
    tgt = target.astype(jnp.int32).reshape(N, 1)                             # [N,1]
    emb = embedding.astype(jnp.float32)                                      # [N,D]

    # Cross-entropy: its own pallas_call, gridded over heads (logits not
    # pinned in VMEM alongside the triplet work).
    xent = pl.pallas_call(
        functools.partial(_xent_kernel, inv_hn=1.0 / (H * N)),
        out_shape=jax.ShapeDtypeStruct((1, 1), jnp.float32),
        grid=(H,),
        in_specs=[
            pl.BlockSpec((1, N, C), lambda h: (h, 0, 0)),
            pl.BlockSpec((N, 1), lambda h: (0, 0)),
        ],
        out_specs=pl.BlockSpec((1, 1), lambda h: (0, 0),
                               memory_space=pltpu.MemorySpace.SMEM),
        scratch_shapes=[pltpu.SMEM((1,), jnp.float32)],
        compiler_params=pltpu.CompilerParams(
            dimension_semantics=("arbitrary",)),
    )(logits, tgt)[0, 0]

    if T == 0:
        # Reference: "no triplets in this batch" -> inter term is 0.
        return xent

    # Triplet tile: multiple of 8 sublanes.  For production sizes pick
    # t_tile as a multiple of 128 so the selector M dim (2*tt) aligns to the
    # 256-wide v6e/v7x MXU (default 256 -> 512 rows); halve on v7x (64 MiB VMEM).
    tt = max(8, min(int(t_tile), ((T + 7) // 8) * 8))
    tt = ((tt + 7) // 8) * 8
    grid_t = (T + tt - 1) // tt
    t_pad = grid_t * tt

    idx = jnp.transpose(triplets.astype(jnp.int32)).reshape(3, T, 1)  # [3,T,1]
    if t_pad != T:
        idx = jnp.pad(idx, ((0, 0), (0, t_pad - T), (0, 0)))

    inter = pl.pallas_call(
        functools.partial(_triplet_kernel,
                          margin=float(margin),
                          num_triplets=T,
                          inv_t=1.0 / T,
                          needs_mask=(t_pad != T)),
        out_shape=jax.ShapeDtypeStruct((1, 1), jnp.float32),
        grid=(grid_t,),
        in_specs=[
            pl.BlockSpec((3, tt, 1), lambda t: (0, t, 0)),   # packed indices
            pl.BlockSpec((N, D), lambda t: (0, 0)),          # emb resident (RHS)
        ],
        out_specs=pl.BlockSpec((1, 1), lambda t: (0, 0),
                               memory_space=pltpu.MemorySpace.SMEM),
        scratch_shapes=[pltpu.SMEM((1,), jnp.float32)],
        compiler_params=pltpu.CompilerParams(
            dimension_semantics=("arbitrary",)),
    )(idx, emb)[0, 0]

    return xent + inter


# --------- deterministic "all triplets" selector (host-side glue) ---------- #
def all_triplets(target_np):
    trips = []
    n = len(target_np)
    for a in range(n):
        for p in range(n):
            if p == a or target_np[p] != target_np[a]:
                continue
            for neg in range(n):
                if target_np[neg] == target_np[a]:
                    continue
                trips.append((a, p, neg))
    return np.asarray(trips, dtype=np.int32)


def _reference(embedding_classify, embedding, target, triplets, margin):
    a = embedding[triplets[:, 0]]
    p = embedding[triplets[:, 1]]
    n = embedding[triplets[:, 2]]
    ap = jnp.sqrt(jnp.sum((a - p) ** 2, axis=1))
    an = jnp.sqrt(jnp.sum((a - n) ** 2, axis=1))
    inter = jnp.sum(jnp.maximum(ap - an + margin, 0.0) ** 2) / triplets.shape[0]

    def ce(logits):
        lse = jax.nn.logsumexp(logits, axis=-1)
        picked = jnp.take_along_axis(logits, target[:, None], axis=-1)[:, 0]
        return jnp.mean(lse - picked)

    xent = sum(ce(l) for l in embedding_classify) / len(embedding_classify)
    return xent + inter


if __name__ == "__main__":
    # small deterministic shapes: batch N=8, embedding dim D=32,
    # n_class C=4 (2 samples per class), H=2 classifier heads.
    N, D, C, H = 8, 32, 4, 2
    margin = 1.0

    key = jax.random.PRNGKey(0)
    k_emb, k_clf = jax.random.split(key, 2)

    target_np = np.array([0, 0, 1, 1, 2, 2, 3, 3], dtype=np.int32)
    target = jnp.asarray(target_np)
    embedding = jax.random.normal(k_emb, (N, D), jnp.float32)
    embedding_classify = [
        jax.random.normal(k, (N, C), jnp.float32)
        for k in jax.random.split(k_clf, H)
    ]
    triplets = jnp.asarray(all_triplets(target_np))   # [48, 3]

    # t_tile=32 -> 2 triplet tiles with a padded tail, exercising both the
    # accumulator path and the last-tile-only mask.
    loss = xent_triplet_loss_v2(embedding_classify, embedding, target,
                                triplets, margin, t_tile=32)
    loss = jax.block_until_ready(loss)

    ref = _reference(embedding_classify, embedding, target, triplets, margin)
    np.testing.assert_allclose(np.asarray(loss), np.asarray(ref),
                               rtol=1e-5, atol=1e-5)
    print("KERNEL_OK")
</pallas_src>

<mosaic_0001>
module attributes {stable_mosaic.version = 11 : i64} {
  func.func @_xent_kernel(%arg0: i32, %arg1: memref<1x8x4xf32, #tpu.memory_space<vmem>>, %arg2: memref<8x1xi32, #tpu.memory_space<vmem>>, %arg3: memref<1x1xf32, #tpu.memory_space<smem>>, %arg4: memref<1xf32, #tpu.memory_space<smem>>) attributes {dimension_semantics = [#tpu.dimension_semantics<arbitrary>], iteration_bounds = array<i64: 2>, scalar_prefetch = 0 : i64, scratch_operands = 1 : i64, tpu.core_type = #tpu.core_type<tc>, window_params = [{transform_indices = @transform_0, window_bounds = array<i64: 1, 8, 4>}, {pipeline_mode = #tpu.pipeline_mode<synchronous>, transform_indices = @transform_1, window_bounds = array<i64: 8, 1>}, {transform_indices = @transform_2, window_bounds = array<i64: 1, 1>}]} {
    %c0_i32 = arith.constant 0 : i32
    %0 = arith.cmpi eq, %arg0, %c0_i32 : i32
    %1 = arith.extui %0 : i1 to i32
    %c0_i32_0 = arith.constant 0 : i32
    %2 = arith.cmpi ne, %1, %c0_i32_0 : i32
    scf.if %2 {
      %cst_12 = arith.constant 0.000000e+00 : f32
      %c0_13 = arith.constant 0 : index
      %33 = memref.load %arg4[%c0_13] : memref<1xf32, #tpu.memory_space<smem>>
      memref.store %cst_12, %arg4[%c0_13] : memref<1xf32, #tpu.memory_space<smem>>
    } else {
    }
    %c0 = arith.constant 0 : index
    %c0_1 = arith.constant 0 : index
    %c0_2 = arith.constant 0 : index
    %3 = vector.load %arg1[%c0, %c0_1, %c0_2] : memref<1x8x4xf32, #tpu.memory_space<vmem>>, vector<1x8x4xf32>
    %4 = vector.shape_cast %3 : vector<1x8x4xf32> to vector<8x4xf32>
    %c0_3 = arith.constant 0 : index
    %c0_4 = arith.constant 0 : index
    %5 = vector.load %arg2[%c0_3, %c0_4] : memref<8x1xi32, #tpu.memory_space<vmem>>, vector<8x1xi32>
    %6 = tpu.iota {dimensions = array<i32: 1>} : vector<8x4xi32>
    %cst = arith.constant dense<0xFF800000> : vector<8xf32>
    %7 = vector.multi_reduction <maximumf>, %4, %cst [1] : vector<8x4xf32> to vector<8xf32>
    %8 = vector.shape_cast %7 : vector<8xf32> to vector<8x1xf32>
    %9 = vector.broadcast %8 : vector<8x1xf32> to vector<8x4xf32>
    %10 = arith.subf %4, %9 : vector<8x4xf32>
    %11 = math.exp %10 : vector<8x4xf32>
    %cst_5 = arith.constant dense<0.000000e+00> : vector<8xf32>
    %12 = vector.multi_reduction <add>, %11, %cst_5 [1] : vector<8x4xf32> to vector<8xf32>
    %13 = vector.shape_cast %12 : vector<8xf32> to vector<8x1xf32>
    %14 = math.log %13 : vector<8x1xf32>
    %15 = arith.addf %8, %14 : vector<8x1xf32>
    %16 = vector.broadcast %5 : vector<8x1xi32> to vector<8x4xi32>
    %17 = arith.cmpi eq, %6, %16 : vector<8x4xi32>
    %cst_6 = arith.constant 0.000000e+00 : f32
    %18 = vector.broadcast %cst_6 : f32 to vector<8x4xf32>
    %19 = arith.select %17, %4, %18 : vector<8x4xi1>, vector<8x4xf32>
    %cst_7 = arith.constant dense<0.000000e+00> : vector<8xf32>
    %20 = vector.multi_reduction <add>, %19, %cst_7 [1] : vector<8x4xf32> to vector<8xf32>
    %21 = vector.shape_cast %20 : vector<8xf32> to vector<8x1xf32>
    %c0_8 = arith.constant 0 : index
    %22 = memref.load %arg4[%c0_8] : memref<1xf32, #tpu.memory_space<smem>>
    %23 = arith.subf %15, %21 : vector<8x1xf32>
    %24 = vector.shape_cast %23 : vector<8x1xf32> to vector<1x8x1xf32>
    %cst_9 = arith.constant dense<0.000000e+00> : vector<1xf32>
    %25 = vector.multi_reduction <add>, %24, %cst_9 [1, 2] : vector<1x8x1xf32> to vector<1xf32>
    %26 = vector.shape_cast %25 : vector<1xf32> to vector<1x1x1xf32>
    %27 = vector.extract %26[0, 0, 0] : f32 from vector<1x1x1xf32>
    %28 = arith.addf %22, %27 : f32
    %c0_10 = arith.constant 0 : index
    %29 = memref.load %arg4[%c0_10] : memref<1xf32, #tpu.memory_space<smem>>
    memref.store %28, %arg4[%c0_10] : memref<1xf32, #tpu.memory_space<smem>>
    %c1_i32 = arith.constant 1 : i32
    %30 = arith.cmpi eq, %arg0, %c1_i32 : i32
    %31 = arith.extui %30 : i1 to i32
    %c0_i32_11 = arith.constant 0 : i32
    %32 = arith.cmpi ne, %31, %c0_i32_11 : i32
    scf.if %32 {
      %c0_12 = arith.constant 0 : index
      %33 = memref.load %arg4[%c0_12] : memref<1xf32, #tpu.memory_space<smem>>
      %cst_13 = arith.constant 6.250000e-02 : f32
      %34 = arith.mulf %33, %cst_13 : f32
      %c0_14 = arith.constant 0 : index
      %c0_15 = arith.constant 0 : index
      %35 = memref.load %arg3[%c0_14, %c0_15] : memref<1x1xf32, #tpu.memory_space<smem>>
      memref.store %34, %arg3[%c0_14, %c0_15] : memref<1x1xf32, #tpu.memory_space<smem>>
    } else {
    }
    return
  }
  func.func @transform_0(%arg0: i32) -> (i32, i32, i32) {
    %c0_i32 = arith.constant 0 : i32
    %c0_i32_0 = arith.constant 0 : i32
    %c0_i32_1 = arith.constant 0 : i32
    return %arg0, %c0_i32, %c0_i32_0 : i32, i32, i32
  }
  func.func @transform_1(%arg0: i32) -> (i32, i32) {
    %c0_i32 = arith.constant 0 : i32
    %c0_i32_0 = arith.constant 0 : i32
    %c0_i32_1 = arith.constant 0 : i32
    return %c0_i32, %c0_i32_0 : i32, i32
  }
  func.func @transform_2(%arg0: i32) -> (i32, i32) {
    %c0_i32 = arith.constant 0 : i32
    %c0_i32_0 = arith.constant 0 : i32
    %c0_i32_1 = arith.constant 0 : i32
    return %c0_i32, %c0_i32_0 : i32, i32
  }
}

</mosaic_0001>

<llo_original>
// kernel: tpu_custom_call.1
$region0: #{tpu_custom_call.1}
  #allocation0 [shape = 'u32[]', space=smem, size = 0x4, offset = 0x4, fixed_abs, tag = 'smem constant byte address 0x4 - core index']
  #allocation1 [shape = 'u32[72,128]{1,0:T(1,128)}', space=vmem, size = 0x9000, scoped, tag = 'internal scratch']
  #allocation2 [shape = 'f32[1]{0:T(128)}', space=smem, size = 0x200, scoped, tag = 'scratch operand']
  %s0 = inlined_call_operand.vmem [shape: f32[2,8,4], index: 0, kind: input, shape index: {}]
  %s1 = inlined_call_operand.vmem [shape: s32[8,1], index: 1, kind: input, shape index: {}]
  %s2 = inlined_call_operand.hbm [shape: f32[1,1], index: 2, kind: output, shape index: {}]
  %s3 = sld [smem:[#allocation0]]
  $region49: #{tpu_custom_call.1} parent=0
    _
  %s5 = ssub.s32 1, %s3
  %s6 = scalar_select 0, %s5, %s3
  $region1: #{tpu_custom_call.1} parent=0
    #allocation3 [shape = 'u8[512]{0}', space=smem, size = 0x200, scoped, tag = 'output window, operand 0, single buffered']
    #allocation4 [shape = 's32[2]{0}', space=sflag, size = 0x8, scoped, tag = 'scoped memory for tpu_custom_call.1']
    %7 = vsyncpa [#allocation4], 0
    loop: start=0, step=1, limit=4
    $region2: #{tpu_custom_call.1} parent=1 // loop_pre_header
      _
    $region3: #{tpu_custom_call.1} parent=1 // loop_header
      %s9 = sphi 0, %s13
      %p10 = scmp.ge.s32.totalorder %s9, 4
      %s19 = sphi 0, %s21
      %s22 = sphi 0, %s19
      %s23 = sphi 0, %s22
      %s39 = sphi 0, %s23
      %s43 = sphi 0, %s43
      %s45 = sphi 0, %s43
      %s46 = sphi 0, %s45
      %s60 = sphi 0, %s46
      %s64 = sphi 0, %s64
      %s66 = sphi 0, %s64
      %s67 = sphi 0, %s66
      %s81 = sphi 0, %s67
    $region4: #{tpu_custom_call.1} parent=1 // loop_header_branch
      %12 = sbr.rel (%p10) target = $region8
    $region5: #{tpu_custom_call.1} parent=1 // loop_body
      %s14 = ssub.s32 %s9, 1
      %s15 = ssub.s32 %s9, 2
      %s16 = sadd.s32 %s9, 1
      %s17 = ssub.s32 %s9, %s16
      %p18 = scmp.eq.s32.totalorder %s17, 0
      %s20 = sadd.s32 %s19, 1
      %s21 = scalar_select %p18, %s19, %s20
      %p24 = pneg %p18
      %p25 = scmp.eq.s32.totalorder %s9, 1
      %p26 = por %p24, %p25
      %p27 = scmp.ne.s32.totalorder %s19, %s22
      %p28 = scmp.eq.s32.totalorder %s9, 0
      %p29 = por %p27, %p28
      %p30 = scmp.ne.s32.totalorder %s19, %s22
      %p31 = scmp.eq.s32.totalorder %s14, 1
      %p32 = por %p30, %p31
      %p33 = scmp.ne.s32.totalorder %s22, %s23
      %p34 = scmp.eq.s32.totalorder %s14, 0
      %p35 = por %p33, %p34
      %p36 = scmp.ne.s32.totalorder %s22, %s23
      %p37 = scmp.eq.s32.totalorder %s15, 1
      %p38 = por %p36, %p37
      %p40 = scmp.ne.s32.totalorder %s23, %s39
      %p41 = scmp.eq.s32.totalorder %s15, 0
      %p42 = por %p40, %p41
      %s44 = sadd.s32 %s43, 1
      %p47 = scmp.eq.s32.totalorder %s9, 1
      %p48 = scmp.ne.s32.totalorder %s43, %s45
      %p49 = scmp.eq.s32.totalorder %s9, 0
      %p50 = por %p48, %p49
      %p51 = scmp.ne.s32.totalorder %s43, %s45
      %p52 = scmp.eq.s32.totalorder %s14, 1
      %p53 = por %p51, %p52
      %p54 = scmp.ne.s32.totalorder %s45, %s46
      %p55 = scmp.eq.s32.totalorder %s14, 0
      %p56 = por %p54, %p55
      %p57 = scmp.ne.s32.totalorder %s45, %s46
      %p58 = scmp.eq.s32.totalorder %s15, 1
      %p59 = por %p57, %p58
      %p61 = scmp.ne.s32.totalorder %s46, %s60
      %p62 = scmp.eq.s32.totalorder %s15, 0
      %p63 = por %p61, %p62
      %s65 = sadd.s32 %s64, 1
      %p68 = scmp.eq.s32.totalorder %s9, 1
      %p69 = scmp.ne.s32.totalorder %s64, %s66
      %p70 = scmp.eq.s32.totalorder %s9, 0
      %p71 = por %p69, %p70
      %p72 = scmp.ne.s32.totalorder %s64, %s66
      %p73 = scmp.eq.s32.totalorder %s14, 1
      %p74 = por %p72, %p73
      %p75 = scmp.ne.s32.totalorder %s66, %s67
      %p76 = scmp.eq.s32.totalorder %s14, 0
      %p77 = por %p75, %p76
      %p78 = scmp.ne.s32.totalorder %s66, %s67
      %p79 = scmp.eq.s32.totalorder %s15, 1
      %p80 = por %p78, %p79
      %p82 = scmp.ne.s32.totalorder %s67, %s81
      %p83 = scmp.eq.s32.totalorder %s15, 0
      %p84 = por %p82, %p83
      %p85 = scmp.le.s32.totalorder 1, %s9
      %p86 = scmp.lt.s32.totalorder %s9, 3
      %p87 = pnand %p85, %p86
      %p88 = pneg %p87
      // Predicated region
      $region9: #{tpu_custom_call.1} parent=5 // pred_check
        _
      $region10: #{tpu_custom_call.1} parent=5 // pred_check_branch
        %90 = sbr.rel (%p87) target = $region12
      $region11: #{tpu_custom_call.1} parent=5 // pred_region
        %s91 = ssub.s32 %s9, 1
        // Predicated region
        $region13: #{tpu_custom_call.1} parent=11 // pred_check
          %p92 = pneg %p56
        $region14: #{tpu_custom_call.1} parent=11 // pred_check_branch
          %94 = sbr.rel (%p92) target = $region16
        $region15: #{tpu_custom_call.1} parent=11 // pred_region
          _
        $region16: #{tpu_custom_call.1} parent=11 // pred_fallthru
          _
      $region12: #{tpu_custom_call.1} parent=5 // pred_fallthru
        _
      %p95 = scmp.lt.s32.totalorder %s9, 2
      // Predicated region
      $region17: #{tpu_custom_call.1} parent=5 // pred_check
        %p96 = pneg %p95
      $region18: #{tpu_custom_call.1} parent=5 // pred_check_branch
        %98 = sbr.rel (%p96) target = $region20
      $region19: #{tpu_custom_call.1} parent=5 // pred_region
        // Predicated region
        $region21: #{tpu_custom_call.1} parent=19 // pred_check
          %p99 = pneg %p29
        $region22: #{tpu_custom_call.1} parent=19 // pred_check_branch
          %101 = sbr.rel (%p99) target = $region24
        $region23: #{tpu_custom_call.1} parent=19 // pred_region
          %p102 = scmp.lt.s32.totalorder %s9, 1
          %s103 = scalar_select %p102, %s9, 1
          %s104 = smul.addr %s103, 8
          %s105 = scalar_lea.vmem %s0, %s104
        $region24: #{tpu_custom_call.1} parent=19 // pred_fallthru
          _
      $region20: #{tpu_custom_call.1} parent=5 // pred_fallthru
        _
      %p106 = scmp.le.s32.totalorder 1, %s9
      %p107 = scmp.lt.s32.totalorder %s9, 3
      %p108 = pnand %p106, %p107
      %p109 = pneg %p108
      // Predicated region
      $region25: #{tpu_custom_call.1} parent=5 // pred_check
        _
      $region26: #{tpu_custom_call.1} parent=5 // pred_check_branch
        %111 = sbr.rel (%p108) target = $region28
      $region27: #{tpu_custom_call.1} parent=5 // pred_region
        %s112 = ssub.s32 %s9, 1
        %p113 = scmp.lt.s32.totalorder %s14, 1
        %s114 = scalar_select %p113, %s14, 1
        %s115 = smul.addr %s114, 8
        %s116 = scalar_lea.vmem %s0, %s115
        %p117 = pneg %p35
        %p118 = pneg %p32
        %p119 = pneg %p56
        %p120 = pneg %p53
        %p121 = pneg %p77
        %p122 = pneg %p74
        %p123 = scmp.lt.s32.totalorder %s14, 1
        %s124 = scalar_select %p123, %s14, 1
        %s125 = smul.addr %s124, 8
        %s126 = scalar_lea.vmem %s0, %s125
        %p127 = scmp.eq.s32.totalorder %s14, 0
        // Predicated region
        $region29: #{tpu_custom_call.1} parent=27 // pred_check
          %p128 = pneg %p127
        $region30: #{tpu_custom_call.1} parent=27 // pred_check_branch
          %130 = sbr.rel (%p128) target = $region32
        $region31: #{tpu_custom_call.1} parent=27 // pred_region
          %s131 = scalar_lea.smem [#allocation2], 0
          %132 = sst [smem:[%s131]] 0.0
        $region32: #{tpu_custom_call.1} parent=27 // pred_fallthru
          _
        %v133 = vld [vmem:[%s126] sm:$0xff]
        %v134 = vld [vmem:[%s1] sm:$0xff]
        %v135 = vlaneseq
        %v136 = vand.u32 %v135, 127
        %vm137 = vcmask 31744
        %v138 = vsel %vm137, %v133, -inf
        %139 = vmax.xlane.f32.xlu0 %v138
        %v140 = vpop.xlane.xlu0 %139
        %v141 = vsub.f32 %v133, %v140
        %v142 = vmul.f32 %v141, 1.442695
        %v143 = vpow.pop %v142
        %v144 = vsel %vm137, %v143, 0.0
        %145 = vadd.xlane.f32.xlu0 %v144
        %v146 = vpop.xlane.xlu0 %145
        %v147 = vlog2.pop %v146
        %v148 = vmul.f32 %v147, 0.6931472
        %v149 = vadd.f32 %v140, %v148
        %150 = vset.pattern.permute.xlu0 0
        %151 = vperm.xlu0 %150, %v134
        %v152 = vpop.permute.xlu0 %151
        %vm153 = vcmp.eq.s32.totalorder %v136, %v152
        %v154 = vsel %vm153, %v133, 0.0
        %v155 = vsel %vm137, %v154, 0.0
        %156 = vadd.xlane.f32.xlu0 %v155
        %v157 = vpop.xlane.xlu0 %156
        %s158 = sld [smem:[#allocation2]]
        %v159 = vsub.f32 %v149, %v157
        %vm160 = vcmask 7168
        %v161 = vsel %vm160, %v159, 0.0
        %162 = vadd.xlane.f32.xlu0 %v161
        %v163 = vpop.xlane.xlu0 %162
        %v164 = vrot.slane %v163, 4
        %v165 = vadd.f32 %v163, %v164
        %v166 = vrot.slane %v165, 2
        %v167 = vadd.f32 %v165, %v166
        %v168 = vrot.slane %v167, 1
        %v169 = vadd.f32 %v167, %v168
        %s170 = vtos %v169
        %s171 = sadd.f32 %s158, %s170
        %s172 = scalar_lea.smem [#allocation2], 0
        %173 = sst [smem:[%s172]] %s171
        %p174 = scmp.eq.s32.totalorder %s14, 1
        // Predicated region
        $region33: #{tpu_custom_call.1} parent=27 // pred_check
          %p175 = pneg %p174
        $region34: #{tpu_custom_call.1} parent=27 // pred_check_branch
          %177 = sbr.rel (%p175) target = $region36
        $region35: #{tpu_custom_call.1} parent=27 // pred_region
          %s178 = sld [smem:[#allocation2]]
          %s179 = smul.f32 %s178, 0.0625
          %s180 = scalar_lea.smem [#allocation3], 0
          %181 = sst [smem:[%s180]] %s179
        $region36: #{tpu_custom_call.1} parent=27 // pred_fallthru
          _
        // Predicated region
        $region37: #{tpu_custom_call.1} parent=27 // pred_check
          %p182 = pneg %p74
        $region38: #{tpu_custom_call.1} parent=27 // pred_check_branch
          %184 = sbr.rel (%p182) target = $region40
        $region39: #{tpu_custom_call.1} parent=27 // pred_region
          %186 = vsyncadd [#allocation4], 0
          %s188 = sshll.u32 %s2, 4
          %s189 = int_to_ptr.hbm [resolvable:$true] %s188
          %191 = dma.smem_to_hbm [#allocation3], 16, %s189, [#allocation4]
        $region40: #{tpu_custom_call.1} parent=27 // pred_fallthru
          _
        // Predicated region
        $region41: #{tpu_custom_call.1} parent=27 // pred_check
          %p192 = pneg %p74
        $region42: #{tpu_custom_call.1} parent=27 // pred_check_branch
          %194 = sbr.rel (%p192) target = $region44
        $region43: #{tpu_custom_call.1} parent=27 // pred_region
          %196 = dma.done [#allocation4], 16
        $region44: #{tpu_custom_call.1} parent=27 // pred_fallthru
          _
        %197 = sfence
      $region28: #{tpu_custom_call.1} parent=5 // pred_fallthru
        _
      %p198 = scmp.le.s32.totalorder 2, %s9
      // Predicated region
      $region45: #{tpu_custom_call.1} parent=5 // pred_check
        %p199 = pneg %p198
      $region46: #{tpu_custom_call.1} parent=5 // pred_check_branch
        %201 = sbr.rel (%p199) target = $region48
      $region47: #{tpu_custom_call.1} parent=5 // pred_region
        %s202 = ssub.s32 %s9, 2
      $region48: #{tpu_custom_call.1} parent=5 // pred_fallthru
        _
    $region6: #{tpu_custom_call.1} parent=1 // loop_footer
      %s13 = sadd.s32 1, %s9
    $region7: #{tpu_custom_call.1} parent=1 // loop_footer_branch
      %8 = sbr.rel target = $region3
    $region8: #{tpu_custom_call.1} parent=1 // loop_exit
      _
    %203 = vsyncpa [#allocation4], 1
    %s204 = scalar_lea.sflag [#allocation4], 1
    %205 = vsyncpa %s204, 1

</llo_original>
